<compile_context>
chip_gen: v6e
topology: v6e:2x2x1
jax: 0.10.0
libtpu: 0.0.40
codegen_flags: <defaults>
</compile_context>

<pallas_src>
import functools

import jax
import jax.numpy as jnp
from jax import lax
from jax.experimental import pallas as pl
from jax.experimental.pallas import tpu as pltpu


def _layernorm2d_kernel(x_ref, w_ref, b_ref, o_ref, *, eps, inv_c):
    # x_ref block: (1, C, TR, L) — channel axis leading, L dense on lanes.
    x = x_ref[0].astype(jnp.float32)                              # (C, TR, L)

    # Channel statistics: reduction over the leading (untiled) axis -> VPU adds.
    mu = jnp.sum(x, axis=0, keepdims=True) * jnp.float32(inv_c)   # (1, TR, L)
    xc = x - mu                                                   # x dead here
    var = jnp.sum(xc * xc, axis=0, keepdims=True) * jnp.float32(inv_c)
    inv_std = lax.rsqrt(var + jnp.float32(eps))                   # EUP (free slot)

    w = w_ref[...].astype(jnp.float32)                            # (C, 1, 1)
    b = b_ref[...].astype(jnp.float32)
    o_ref[0] = (xc * (w * inv_std) + b).astype(o_ref.dtype)


def _sublane_min(itemsize):
    # Minimum second-to-last block dim per dtype packing (f32 / bf16 / int8-fp8).
    return {4: 8, 2: 16, 1: 32}.get(int(itemsize), 8)


def _pick_row_tile(C, rows, lane, sublane_min, budget_bytes, n_batch,
                   min_steps=8):
    """Pick TR: divides `rows`, is a multiple of `sublane_min` (or equals the
    full extent), and keeps the f32 compute block (C, TR, lane) under budget.
    Prefers tiles that still give >= `min_steps` grid steps (megacore / pipeline
    amortization); falls back to the smallest valid tile if none fit."""
    bytes_per_row = C * lane * 4  # f32 compute copy dominates the footprint
    candidates = sorted({d for d in range(1, rows + 1)
                         if rows % d == 0
                         and (d % sublane_min == 0 or d == rows)})
    fitting = [d for d in candidates if d * bytes_per_row <= budget_bytes]
    pool = fitting if fitting else [candidates[0]]
    stepped = [d for d in pool if n_batch * (rows // d) >= min_steps]
    return max(stepped) if stepped else max(pool)


def layernorm2d_forward(x, weight, bias, eps=1e-6):
    """LayerNorm over the channel axis of an NCHW tensor (PyTorch LayerNorm2d)."""
    N, C, H, W = x.shape
    S = H * W
    in_itemsize = x.dtype.itemsize
    sub_min = _sublane_min(in_itemsize)

    # Generation-aware VMEM capacity (v5e/v6e: 128 MiB, v7x: 64 MiB per TC).
    try:
        vmem_cap = int(getattr(pltpu.get_tpu_info(), "vmem_capacity_bytes",
                               64 * 1024 * 1024))
    except Exception:
        vmem_cap = 64 * 1024 * 1024
    if vmem_cap <= 64 * 1024 * 1024:
        block_budget = 2 * 1024 * 1024      # v7x: keep total well under 64 MiB
    else:
        block_budget = 6 * 1024 * 1024      # v5e/v6e: bigger tiles amortize DMA

    w3 = weight.reshape(C, 1, 1).astype(jnp.float32)
    b3 = bias.reshape(C, 1, 1).astype(jnp.float32)

    if S % 128 == 0:
        # Lane-dense path: fold H*W into (rows, 128) -> unmasked full-lane vst.
        lane = 128
        rows = S // 128
        xr = x.reshape(N, C, rows, lane)
    else:
        # Fallback: plain NCHW tiling (last dim == full W, possibly masked).
        lane = W
        rows = H
        xr = x

    TR = _pick_row_tile(C, rows, lane, sub_min, block_budget, N)
    grid = (N, rows // TR)

    blk_io = C * TR * lane * in_itemsize
    blk_f32 = C * TR * lane * 4
    # 2x-buffered input + 2x-buffered output (io dtype) + ~2 f32 temps + headroom,
    # capped at 75% of the chip's physical VMEM.
    vmem_limit = int(min(int(0.75 * vmem_cap),
                         max(16 * 1024 * 1024,
                             4 * blk_io + 3 * blk_f32 + (2 << 20))))

    kernel = functools.partial(_layernorm2d_kernel, eps=float(eps),
                               inv_c=1.0 / float(C))
    out = pl.pallas_call(
        kernel,
        out_shape=jax.ShapeDtypeStruct(xr.shape, x.dtype),
        grid=grid,
        in_specs=[
            pl.BlockSpec((1, C, TR, lane), lambda n, r: (n, 0, r, 0)),
            pl.BlockSpec((C, 1, 1), lambda n, r: (0, 0, 0)),
            pl.BlockSpec((C, 1, 1), lambda n, r: (0, 0, 0)),
        ],
        out_specs=pl.BlockSpec((1, C, TR, lane), lambda n, r: (n, 0, r, 0)),
        compiler_params=pltpu.CompilerParams(
            dimension_semantics=("parallel", "parallel"),
            vmem_limit_bytes=vmem_limit,
        ),
    )(xr, w3, b3)
    return out.reshape(N, C, H, W)


# ---------------- pure-JAX reference (for correctness check) ----------------
def layernorm2d_reference(x, weight, bias, eps=1e-6):
    xf = x.astype(jnp.float32)
    mu = jnp.mean(xf, axis=1, keepdims=True)
    var = jnp.mean((xf - mu) ** 2, axis=1, keepdims=True)
    y = (xf - mu) / jnp.sqrt(var + eps)
    C = x.shape[1]
    out = weight.reshape(1, C, 1, 1) * y + bias.reshape(1, C, 1, 1)
    return out.astype(x.dtype)


if __name__ == "__main__":
    N, C, H, W = 2, 4, 16, 16
    eps = 1e-6

    key = jax.random.PRNGKey(0)
    kx, kw, kb = jax.random.split(key, 3)
    x = jax.random.normal(kx, (N, C, H, W), jnp.float32)
    weight = 1.0 + 0.1 * jax.random.normal(kw, (C,), jnp.float32)
    bias = 0.1 * jax.random.normal(kb, (C,), jnp.float32)

    out = jax.block_until_ready(layernorm2d_forward(x, weight, bias, eps=eps))
    ref = jax.block_until_ready(layernorm2d_reference(x, weight, bias, eps=eps))

    if out.shape != x.shape:
        raise ValueError(f"bad output shape {out.shape}, expected {x.shape}")
    err = float(jnp.max(jnp.abs(out - ref)))
    if err > 1e-4:
        raise ValueError(f"kernel/reference mismatch, max abs err = {err}")

    print("KERNEL_OK")
</pallas_src>

<mosaic_0001>
module attributes {stable_mosaic.version = 11 : i64} {
  func.func @_layernorm2d_kernel(%arg0: i32, %arg1: i32, %arg2: memref<1x4x2x128xf32, #tpu.memory_space<vmem>>, %arg3: memref<4x1x1xf32, #tpu.memory_space<vmem>>, %arg4: memref<4x1x1xf32, #tpu.memory_space<vmem>>, %arg5: memref<1x4x2x128xf32, #tpu.memory_space<vmem>>) attributes {dimension_semantics = [#tpu.dimension_semantics<parallel>, #tpu.dimension_semantics<parallel>], iteration_bounds = array<i64: 2, 1>, scalar_prefetch = 0 : i64, scratch_operands = 0 : i64, tpu.core_type = #tpu.core_type<tc>, window_params = [{transform_indices = @transform_0, window_bounds = array<i64: 1, 4, 2, 128>}, {pipeline_mode = #tpu.pipeline_mode<synchronous>, transform_indices = @transform_1, window_bounds = array<i64: 4, 1, 1>}, {pipeline_mode = #tpu.pipeline_mode<synchronous>, transform_indices = @transform_2, window_bounds = array<i64: 4, 1, 1>}, {transform_indices = @transform_3, window_bounds = array<i64: 1, 4, 2, 128>}]} {
    %c0 = arith.constant 0 : index
    %c0_0 = arith.constant 0 : index
    %c0_1 = arith.constant 0 : index
    %c0_2 = arith.constant 0 : index
    %0 = vector.load %arg2[%c0, %c0_0, %c0_1, %c0_2] : memref<1x4x2x128xf32, #tpu.memory_space<vmem>>, vector<1x4x2x128xf32>
    %1 = vector.shape_cast %0 : vector<1x4x2x128xf32> to vector<4x2x128xf32>
    %cst = arith.constant dense<0.000000e+00> : vector<2x128xf32>
    %2 = vector.multi_reduction <add>, %1, %cst [0] : vector<4x2x128xf32> to vector<2x128xf32>
    %3 = vector.shape_cast %2 : vector<2x128xf32> to vector<1x2x128xf32>
    %cst_3 = arith.constant 2.500000e-01 : f32
    %4 = vector.broadcast %cst_3 : f32 to vector<1x2x128xf32>
    %5 = arith.mulf %3, %4 : vector<1x2x128xf32>
    %6 = vector.broadcast %5 : vector<1x2x128xf32> to vector<4x2x128xf32>
    %7 = arith.subf %1, %6 : vector<4x2x128xf32>
    %8 = arith.mulf %7, %7 : vector<4x2x128xf32>
    %cst_4 = arith.constant dense<0.000000e+00> : vector<2x128xf32>
    %9 = vector.multi_reduction <add>, %8, %cst_4 [0] : vector<4x2x128xf32> to vector<2x128xf32>
    %10 = vector.shape_cast %9 : vector<2x128xf32> to vector<1x2x128xf32>
    %cst_5 = arith.constant 2.500000e-01 : f32
    %11 = vector.broadcast %cst_5 : f32 to vector<1x2x128xf32>
    %12 = arith.mulf %10, %11 : vector<1x2x128xf32>
    %cst_6 = arith.constant 9.99999997E-7 : f32
    %13 = vector.broadcast %cst_6 : f32 to vector<1x2x128xf32>
    %14 = arith.addf %12, %13 : vector<1x2x128xf32>
    %15 = math.rsqrt %14 : vector<1x2x128xf32>
    %c0_7 = arith.constant 0 : index
    %c0_8 = arith.constant 0 : index
    %c0_9 = arith.constant 0 : index
    %16 = vector.load %arg3[%c0_7, %c0_8, %c0_9] : memref<4x1x1xf32, #tpu.memory_space<vmem>>, vector<4x1x1xf32>
    %c0_10 = arith.constant 0 : index
    %c0_11 = arith.constant 0 : index
    %c0_12 = arith.constant 0 : index
    %17 = vector.load %arg4[%c0_10, %c0_11, %c0_12] : memref<4x1x1xf32, #tpu.memory_space<vmem>>, vector<4x1x1xf32>
    %18 = vector.broadcast %16 : vector<4x1x1xf32> to vector<4x2x128xf32>
    %19 = vector.broadcast %15 : vector<1x2x128xf32> to vector<4x2x128xf32>
    %20 = arith.mulf %18, %19 : vector<4x2x128xf32>
    %21 = arith.mulf %7, %20 : vector<4x2x128xf32>
    %22 = vector.broadcast %17 : vector<4x1x1xf32> to vector<4x2x128xf32>
    %23 = arith.addf %21, %22 : vector<4x2x128xf32>
    %c0_13 = arith.constant 0 : index
    %c0_14 = arith.constant 0 : index
    %c0_15 = arith.constant 0 : index
    %c0_16 = arith.constant 0 : index
    %24 = vector.load %arg5[%c0_13, %c0_14, %c0_15, %c0_16] : memref<1x4x2x128xf32, #tpu.memory_space<vmem>>, vector<1x4x2x128xf32>
    %25 = vector.shape_cast %24 : vector<1x4x2x128xf32> to vector<4x2x128xf32>
    %26 = vector.shape_cast %23 : vector<4x2x128xf32> to vector<1x4x2x128xf32>
    tpu.vector_store %arg5[%c0_13, %c0_14, %c0_15, %c0_16], %26 {strides = array<i32>} : memref<1x4x2x128xf32, #tpu.memory_space<vmem>>, vector<1x4x2x128xf32>,
    return
  }
  func.func @transform_0(%arg0: i32, %arg1: i32) -> (i32, i32, i32, i32) {
    %c0_i32 = arith.constant 0 : i32
    %c0_i32_0 = arith.constant 0 : i32
    %c0_i32_1 = arith.constant 0 : i32
    return %arg0, %c0_i32, %arg1, %c0_i32_0 : i32, i32, i32, i32
  }
  func.func @transform_1(%arg0: i32, %arg1: i32) -> (i32, i32, i32) {
    %c0_i32 = arith.constant 0 : i32
    %c0_i32_0 = arith.constant 0 : i32
    %c0_i32_1 = arith.constant 0 : i32
    %c0_i32_2 = arith.constant 0 : i32
    return %c0_i32, %c0_i32_0, %c0_i32_1 : i32, i32, i32
  }
  func.func @transform_2(%arg0: i32, %arg1: i32) -> (i32, i32, i32) {
    %c0_i32 = arith.constant 0 : i32
    %c0_i32_0 = arith.constant 0 : i32
    %c0_i32_1 = arith.constant 0 : i32
    %c0_i32_2 = arith.constant 0 : i32
    return %c0_i32, %c0_i32_0, %c0_i32_1 : i32, i32, i32
  }
  func.func @transform_3(%arg0: i32, %arg1: i32) -> (i32, i32, i32, i32) {
    %c0_i32 = arith.constant 0 : i32
    %c0_i32_0 = arith.constant 0 : i32
    %c0_i32_1 = arith.constant 0 : i32
    return %arg0, %c0_i32, %arg1, %c0_i32_0 : i32, i32, i32, i32
  }
}

</mosaic_0001>

<llo_original>
// kernel: tpu_custom_call.1
$region0: #{tpu_custom_call.1}
  #allocation0 [shape = 'u32[]', space=smem, size = 0x4, offset = 0x4, fixed_abs, tag = 'smem constant byte address 0x4 - core index']
  #allocation1 [shape = 'u32[144,128]{1,0:T(1,128)}', space=vmem, size = 0x12000, scoped, tag = 'internal scratch']
  %s0 = inlined_call_operand.hbm [shape: f32[2,4,2,128], index: 0, kind: input, shape index: {}]
  %s1 = inlined_call_operand.vmem [shape: f32[4,1,1], index: 1, kind: input, shape index: {}]
  %s2 = inlined_call_operand.vmem [shape: f32[4,1,1], index: 2, kind: input, shape index: {}]
  %s3 = inlined_call_operand.hbm [shape: f32[2,4,2,128], index: 3, kind: output, shape index: {}]
  %s4 = sld [smem:[#allocation0]]
  $region49: #{tpu_custom_call.1} parent=0
    _
  %s6 = ssub.s32 1, %s4
  %s7 = scalar_select 0, %s6, %s4
  $region1: #{tpu_custom_call.1} parent=0
    #allocation2 [shape = 'u8[8192]{0}', space=vmem, size = 0x2000, scoped, tag = 'input window, operand 0']
    #allocation3 [shape = 's32[2]{0}', space=sflag, size = 0x8, scoped, tag = 'scoped memory for tpu_custom_call.1']
    #allocation4 [shape = 's32[2]{0}', space=sflag, size = 0x8, scoped, tag = 'scoped memory for tpu_custom_call.1']
    #allocation5 [shape = 'u8[8192]{0}', space=vmem, size = 0x2000, scoped, tag = 'output window, operand 0']
    %8 = vsyncpa [#allocation3], 0
    %s9 = scalar_lea.sflag [#allocation3], 1
    %10 = vsyncpa %s9, 0
    %11 = vsyncpa [#allocation4], 0
    %s12 = scalar_lea.sflag [#allocation4], 1
    %13 = vsyncpa %s12, 0
    loop: start=0, step=1, limit=4
    $region2: #{tpu_custom_call.1} parent=1 // loop_pre_header
      _
    $region3: #{tpu_custom_call.1} parent=1 // loop_header
      %s15 = sphi 0, %s19
      %p16 = scmp.ge.s32.totalorder %s15, 4
      %s22 = sphi 0, %s34
      %s23 = sphi 0, %s30
      %s24 = sphi 0, %s22
      %s25 = sphi 0, %s23
      %s26 = sphi 0, %s24
      %s27 = sphi 0, %s25
      %s39 = sphi 0, %s41
      %s42 = sphi 0, %s39
      %s43 = sphi 0, %s42
      %s59 = sphi 0, %s43
      %s63 = sphi 0, %s63
      %s65 = sphi 0, %s63
      %s66 = sphi 0, %s65
      %s80 = sphi 0, %s66
      %s84 = sphi 0, %s84
      %s86 = sphi 0, %s84
      %s87 = sphi 0, %s86
      %s101 = sphi 0, %s87
      %s109 = sphi 0, %s111
      %s112 = sphi 0, %s109
      %s113 = sphi 0, %s112
      %s129 = sphi 0, %s113
    $region4: #{tpu_custom_call.1} parent=1 // loop_header_branch
      %18 = sbr.rel (%p16) target = $region8
    $region5: #{tpu_custom_call.1} parent=1 // loop_body
      %s20 = ssub.s32 %s15, 1
      %s21 = ssub.s32 %s15, 2
      %s28 = sadd.s32 1, %s23
      %p29 = scmp.ge.s32.totalorder %s28, 1
      %s30 = scalar_select %p29, 0, %s28
      %s31 = sadd.s32 1, %s22
      %s32 = scalar_select %p29, %s31, %s22
      %p33 = scmp.ge.s32.totalorder %s32, 2
      %s34 = scalar_select %p33, 0, %s32
      %s35 = ssub.s32 %s22, %s34
      %s36 = ssub.s32 %s23, %s30
      %s37 = sor.u32 %s35, %s36
      %p38 = scmp.eq.s32.totalorder %s37, 0
      %s40 = sadd.s32 %s39, 1
      %s41 = scalar_select %p38, %s39, %s40
      %p44 = pneg %p38
      %p45 = scmp.eq.s32.totalorder %s15, 1
      %p46 = por %p44, %p45
      %p47 = scmp.ne.s32.totalorder %s39, %s42
      %p48 = scmp.eq.s32.totalorder %s15, 0
      %p49 = por %p47, %p48
      %p50 = scmp.ne.s32.totalorder %s39, %s42
      %p51 = scmp.eq.s32.totalorder %s20, 1
      %p52 = por %p50, %p51
      %p53 = scmp.ne.s32.totalorder %s42, %s43
      %p54 = scmp.eq.s32.totalorder %s20, 0
      %p55 = por %p53, %p54
      %p56 = scmp.ne.s32.totalorder %s42, %s43
      %p57 = scmp.eq.s32.totalorder %s21, 1
      %p58 = por %p56, %p57
      %p60 = scmp.ne.s32.totalorder %s43, %s59
      %p61 = scmp.eq.s32.totalorder %s21, 0
      %p62 = por %p60, %p61
      %s64 = sadd.s32 %s63, 1
      %p67 = scmp.eq.s32.totalorder %s15, 1
      %p68 = scmp.ne.s32.totalorder %s63, %s65
      %p69 = scmp.eq.s32.totalorder %s15, 0
      %p70 = por %p68, %p69
      %p71 = scmp.ne.s32.totalorder %s63, %s65
      %p72 = scmp.eq.s32.totalorder %s20, 1
      %p73 = por %p71, %p72
      %p74 = scmp.ne.s32.totalorder %s65, %s66
      %p75 = scmp.eq.s32.totalorder %s20, 0
      %p76 = por %p74, %p75
      %p77 = scmp.ne.s32.totalorder %s65, %s66
      %p78 = scmp.eq.s32.totalorder %s21, 1
      %p79 = por %p77, %p78
      %p81 = scmp.ne.s32.totalorder %s66, %s80
      %p82 = scmp.eq.s32.totalorder %s21, 0
      %p83 = por %p81, %p82
      %s85 = sadd.s32 %s84, 1
      %p88 = scmp.eq.s32.totalorder %s15, 1
      %p89 = scmp.ne.s32.totalorder %s84, %s86
      %p90 = scmp.eq.s32.totalorder %s15, 0
      %p91 = por %p89, %p90
      %p92 = scmp.ne.s32.totalorder %s84, %s86
      %p93 = scmp.eq.s32.totalorder %s20, 1
      %p94 = por %p92, %p93
      %p95 = scmp.ne.s32.totalorder %s86, %s87
      %p96 = scmp.eq.s32.totalorder %s20, 0
      %p97 = por %p95, %p96
      %p98 = scmp.ne.s32.totalorder %s86, %s87
      %p99 = scmp.eq.s32.totalorder %s21, 1
      %p100 = por %p98, %p99
      %p102 = scmp.ne.s32.totalorder %s87, %s101
      %p103 = scmp.eq.s32.totalorder %s21, 0
      %p104 = por %p102, %p103
      %s105 = ssub.s32 %s22, %s34
      %s106 = ssub.s32 %s23, %s30
      %s107 = sor.u32 %s105, %s106
      %p108 = scmp.eq.s32.totalorder %s107, 0
      %s110 = sadd.s32 %s109, 1
      %s111 = scalar_select %p108, %s109, %s110
      %p114 = pneg %p108
      %p115 = scmp.eq.s32.totalorder %s15, 1
      %p116 = por %p114, %p115
      %p117 = scmp.ne.s32.totalorder %s109, %s112
      %p118 = scmp.eq.s32.totalorder %s15, 0
      %p119 = por %p117, %p118
      %p120 = scmp.ne.s32.totalorder %s109, %s112
      %p121 = scmp.eq.s32.totalorder %s20, 1
      %p122 = por %p120, %p121
      %p123 = scmp.ne.s32.totalorder %s112, %s113
      %p124 = scmp.eq.s32.totalorder %s20, 0
      %p125 = por %p123, %p124
      %p126 = scmp.ne.s32.totalorder %s112, %s113
      %p127 = scmp.eq.s32.totalorder %s21, 1
      %p128 = por %p126, %p127
      %p130 = scmp.ne.s32.totalorder %s113, %s129
      %p131 = scmp.eq.s32.totalorder %s21, 0
      %p132 = por %p130, %p131
      %p133 = scmp.le.s32.totalorder 1, %s15
      %p134 = scmp.lt.s32.totalorder %s15, 3
      %p135 = pnand %p133, %p134
      %p136 = pneg %p135
      // Predicated region
      $region9: #{tpu_custom_call.1} parent=5 // pred_check
        _
      $region10: #{tpu_custom_call.1} parent=5 // pred_check_branch
        %138 = sbr.rel (%p135) target = $region12
      $region11: #{tpu_custom_call.1} parent=5 // pred_region
        %s139 = ssub.s32 %s15, 1
        // Predicated region
        $region13: #{tpu_custom_call.1} parent=11 // pred_check
          %p140 = pneg %p76
        $region14: #{tpu_custom_call.1} parent=11 // pred_check_branch
          %142 = sbr.rel (%p140) target = $region16
        $region15: #{tpu_custom_call.1} parent=11 // pred_region
          _
        $region16: #{tpu_custom_call.1} parent=11 // pred_fallthru
          _
        // Predicated region
        $region17: #{tpu_custom_call.1} parent=11 // pred_check
          %p143 = pneg %p97
        $region18: #{tpu_custom_call.1} parent=11 // pred_check_branch
          %145 = sbr.rel (%p143) target = $region20
        $region19: #{tpu_custom_call.1} parent=11 // pred_region
          _
        $region20: #{tpu_custom_call.1} parent=11 // pred_fallthru
          _
      $region12: #{tpu_custom_call.1} parent=5 // pred_fallthru
        _
      %p146 = scmp.lt.s32.totalorder %s15, 2
      // Predicated region
      $region21: #{tpu_custom_call.1} parent=5 // pred_check
        %p147 = pneg %p146
      $region22: #{tpu_custom_call.1} parent=5 // pred_check_branch
        %149 = sbr.rel (%p147) target = $region24
      $region23: #{tpu_custom_call.1} parent=5 // pred_region
        // Predicated region
        $region25: #{tpu_custom_call.1} parent=23 // pred_check
          %p150 = pneg %p49
        $region26: #{tpu_custom_call.1} parent=23 // pred_check_branch
          %152 = sbr.rel (%p150) target = $region28
        $region27: #{tpu_custom_call.1} parent=23 // pred_region
          %s153 = sand.u32 %s39, 1
          %s154 = scalar_lea.sflag [#allocation3], %s153
          %s155 = sand.u32 %s39, 1
          %s156 = smul.addr %s155, 8
          %s157 = scalar_lea.vmem [#allocation2], %s156
          %s159 = ssub.s32 128, 128
          %160 = vsyncadd %s154, %s159
          %s161 = smul.addr %s22, 4
          %s162 = sadd.s32 %s23, %s161
          %s163 = smul.addr %s162, 32
          %s164 = scalar_lea.hbm %s0, %s163
          %s165 = sshll.u32 %s157, 4
          %s166 = int_to_ptr.vmem [resolvable:$true] %s165
          %171 = dma.hbm_to_vmem [thread:$0]  %s164, 128, %s166, %s154, 32, 32, 2
        $region28: #{tpu_custom_call.1} parent=23 // pred_fallthru
          _
      $region24: #{tpu_custom_call.1} parent=5 // pred_fallthru
        _
      %p172 = scmp.le.s32.totalorder 1, %s15
      %p173 = scmp.lt.s32.totalorder %s15, 3
      %p174 = pnand %p172, %p173
      %p175 = pneg %p174
      // Predicated region
      $region29: #{tpu_custom_call.1} parent=5 // pred_check
        _
      $region30: #{tpu_custom_call.1} parent=5 // pred_check_branch
        %177 = sbr.rel (%p174) target = $region32
      $region31: #{tpu_custom_call.1} parent=5 // pred_region
        %s178 = ssub.s32 %s15, 1
        %s179 = sand.u32 %s42, 1
        %s180 = scalar_lea.sflag [#allocation3], %s179
        %s181 = sand.u32 %s42, 1
        %s182 = smul.addr %s181, 8
        %s183 = scalar_lea.vmem [#allocation2], %s182
        // Predicated region
        $region33: #{tpu_custom_call.1} parent=31 // pred_check
          %p184 = pneg %p55
        $region34: #{tpu_custom_call.1} parent=31 // pred_check_branch
          %186 = sbr.rel (%p184) target = $region36
        $region35: #{tpu_custom_call.1} parent=31 // pred_region
          %187 = dma.done %s180, 128
        $region36: #{tpu_custom_call.1} parent=31 // pred_fallthru
          _
        %s188 = sand.u32 %s42, 1
        %s189 = scalar_lea.sflag [#allocation3], %s188
        %s190 = sand.u32 %s42, 1
        %s191 = smul.addr %s190, 8
        %s192 = scalar_lea.vmem [#allocation2], %s191
        %p193 = pneg %p55
        %p194 = pneg %p52
        %p195 = pneg %p76
        %p196 = pneg %p73
        %p197 = pneg %p97
        %p198 = pneg %p94
        %p199 = pneg %p125
        %p200 = pneg %p122
        %s201 = sand.u32 %s112, 1
        %s202 = scalar_lea.sflag [#allocation4], %s201
        %s203 = sand.u32 %s112, 1
        %s204 = smul.addr %s203, 8
        %s205 = scalar_lea.vmem [#allocation5], %s204
        %v206 = vld [vmem:[%s183] sm:$0x3]
        %v207 = vld [vmem:[%s183 + $0x2] sm:$0x3]
        %v208 = vld [vmem:[%s183 + $0x4] sm:$0x3]
        %v209 = vld [vmem:[%s183 + $0x6] sm:$0x3]
        %vm210 = vcmask 1041408
        %v211 = vsel %vm210, %v206, 0.0
        %v212 = vsel %vm210, %v207, 0.0
        %v213 = vadd.f32 %v211, %v212
        %v214 = vsel %vm210, %v208, 0.0
        %v215 = vadd.f32 %v213, %v214
        %v216 = vsel %vm210, %v209, 0.0
        %v217 = vadd.f32 %v215, %v216
        %v218 = vmul.f32 %v217, 0.25
        %v219 = vsub.f32 %v206, %v218
        %v220 = vsub.f32 %v207, %v218
        %v221 = vsub.f32 %v208, %v218
        %v222 = vsub.f32 %v209, %v218
        %v223 = vmul.f32 %v219, %v219
        %v224 = vmul.f32 %v220, %v220
        %v225 = vmul.f32 %v221, %v221
        %v226 = vmul.f32 %v222, %v222
        %v227 = vsel %vm210, %v223, 0.0
        %v228 = vsel %vm210, %v224, 0.0
        %v229 = vadd.f32 %v227, %v228
        %v230 = vsel %vm210, %v225, 0.0
        %v231 = vadd.f32 %v229, %v230
        %v232 = vsel %vm210, %v226, 0.0
        %v233 = vadd.f32 %v231, %v232
        %v234 = vmul.f32 %v233, 0.25
        %v235 = vadd.f32 %v234, 1e-06
        %v236 = vrsqrt.pop %v235
        %v237 = vld [vmem:[%s1] sm:$0x1]
        %v238 = vld [vmem:[%s1 + $0x1] sm:$0x1]
        %v239 = vld [vmem:[%s1 + $0x2] sm:$0x1]
        %v240 = vld [vmem:[%s1 + $0x3] sm:$0x1]
        %v241 = vld [vmem:[%s2] sm:$0x1]
        %v242 = vld [vmem:[%s2 + $0x1] sm:$0x1]
        %v243 = vld [vmem:[%s2 + $0x2] sm:$0x1]
        %v244 = vld [vmem:[%s2 + $0x3] sm:$0x1]
        %v249 = vlaneseq
        %v250 = vshrl.u32 %v249, 7
        %v251 = vsub.s32 0, %v250
        %v252 = vrot.slane %v237, %v251
        %v253 = vlaneseq
        %v254 = vshrl.u32 %v253, 7
        %v255 = vsub.s32 0, %v254
        %v256 = vrot.slane %v238, %v255
        %v257 = vlaneseq
        %v258 = vshrl.u32 %v257, 7
        %v259 = vsub.s32 0, %v258
        %v260 = vrot.slane %v239, %v259
        %v261 = vlaneseq
        %v262 = vshrl.u32 %v261, 7
        %v263 = vsub.s32 0, %v262
        %v264 = vrot.slane %v240, %v263
        %265 = vset.pattern.permute.xlu0 0
        %266 = vperm.xlu0 %265, %v252
        %v267 = vpop.permute.xlu0 %266
        %269 = vset.pattern.permute.xlu0 0
        %270 = vperm.xlu0 %269, %v256
        %v271 = vpop.permute.xlu0 %270
        %273 = vset.pattern.permute.xlu0 0
        %274 = vperm.xlu0 %273, %v260
        %v275 = vpop.permute.xlu0 %274
        %277 = vset.pattern.permute.xlu0 0
        %278 = vperm.xlu0 %277, %v264
        %v279 = vpop.permute.xlu0 %278
        %v281 = vmul.f32 %v267, %v236
        %v282 = vmul.f32 %v271, %v236
        %v283 = vmul.f32 %v275, %v236
        %v284 = vmul.f32 %v279, %v236
        %v285 = vmul.f32 %v219, %v281
        %v286 = vmul.f32 %v220, %v282
        %v287 = vmul.f32 %v221, %v283
        %v288 = vmul.f32 %v222, %v284
        %v293 = vlaneseq
        %v294 = vshrl.u32 %v293, 7
        %v295 = vsub.s32 0, %v294
        %v296 = vrot.slane %v241, %v295
        %v297 = vlaneseq
        %v298 = vshrl.u32 %v297, 7
        %v299 = vsub.s32 0, %v298
        %v300 = vrot.slane %v242, %v299
        %v301 = vlaneseq
        %v302 = vshrl.u32 %v301, 7
        %v303 = vsub.s32 0, %v302
        %v304 = vrot.slane %v243, %v303
        %v305 = vlaneseq
        %v306 = vshrl.u32 %v305, 7
        %v307 = vsub.s32 0, %v306
        %v308 = vrot.slane %v244, %v307
        %309 = vset.pattern.permute.xlu0 0
        %310 = vperm.xlu0 %309, %v296
        %v311 = vpop.permute.xlu0 %310
        %313 = vset.pattern.permute.xlu0 0
        %314 = vperm.xlu0 %313, %v300
        %v315 = vpop.permute.xlu0 %314
        %317 = vset.pattern.permute.xlu0 0
        %318 = vperm.xlu0 %317, %v304
        %v319 = vpop.permute.xlu0 %318
        %321 = vset.pattern.permute.xlu0 0
        %322 = vperm.xlu0 %321, %v308
        %v323 = vpop.permute.xlu0 %322
        %v325 = vadd.f32 %v285, %v311
        %v326 = vadd.f32 %v286, %v315
        %v327 = vadd.f32 %v287, %v319
        %v328 = vadd.f32 %v288, %v323
        %329 = vst [vmem:[%s205] sm:$0x3] %v325
        %330 = vst [vmem:[%s205 + $0x2] sm:$0x3] %v326
        %331 = vst [vmem:[%s205 + $0x4] sm:$0x3] %v327
        %332 = vst [vmem:[%s205 + $0x6] sm:$0x3] %v328
        %s333 = sand.u32 %s112, 1
        %s334 = scalar_lea.sflag [#allocation4], %s333
        %s335 = sand.u32 %s112, 1
        %s336 = smul.addr %s335, 8
        %s337 = scalar_lea.vmem [#allocation5], %s336
        // Predicated region
        $region37: #{tpu_custom_call.1} parent=31 // pred_check
          %p338 = pneg %p122
        $region38: #{tpu_custom_call.1} parent=31 // pred_check_branch
          %340 = sbr.rel (%p338) target = $region40
        $region39: #{tpu_custom_call.1} parent=31 // pred_region
          %s342 = ssub.s32 128, 128
          %343 = vsyncadd %s334, %s342
          %s344 = smul.addr %s24, 4
          %s345 = sadd.s32 %s25, %s344
          %s346 = smul.addr %s345, 32
          %s347 = scalar_lea.hbm %s3, %s346
          %s348 = sshll.u32 %s337, 4
          %s349 = int_to_ptr.vmem [resolvable:$true] %s348
          %354 = dma.vmem_to_hbm [thread:$0]  %s349, 128, %s347, %s334, 32, 32, 2
        $region40: #{tpu_custom_call.1} parent=31 // pred_fallthru
          _
      $region32: #{tpu_custom_call.1} parent=5 // pred_fallthru
        _
      %p355 = scmp.le.s32.totalorder 2, %s15
      // Predicated region
      $region41: #{tpu_custom_call.1} parent=5 // pred_check
        %p356 = pneg %p355
      $region42: #{tpu_custom_call.1} parent=5 // pred_check_branch
        %358 = sbr.rel (%p356) target = $region44
      $region43: #{tpu_custom_call.1} parent=5 // pred_region
        %s359 = ssub.s32 %s15, 2
        // Predicated region
        $region45: #{tpu_custom_call.1} parent=43 // pred_check
          %p360 = pneg %p128
        $region46: #{tpu_custom_call.1} parent=43 // pred_check_branch
          %362 = sbr.rel (%p360) target = $region48
        $region47: #{tpu_custom_call.1} parent=43 // pred_region
          %s363 = sand.u32 %s113, 1
          %s364 = scalar_lea.sflag [#allocation4], %s363
          %s365 = sand.u32 %s113, 1
          %s366 = smul.addr %s365, 8
          %s367 = scalar_lea.vmem [#allocation5], %s366
          %368 = dma.done %s364, 128
        $region48: #{tpu_custom_call.1} parent=43 // pred_fallthru
          _
      $region44: #{tpu_custom_call.1} parent=5 // pred_fallthru
        _
    $region6: #{tpu_custom_call.1} parent=1 // loop_footer
      %s19 = sadd.s32 1, %s15
    $region7: #{tpu_custom_call.1} parent=1 // loop_footer_branch
      %14 = sbr.rel target = $region3
    $region8: #{tpu_custom_call.1} parent=1 // loop_exit
      _
    %369 = vsyncpa [#allocation3], 1
    %s370 = scalar_lea.sflag [#allocation3], 1
    %371 = vsyncpa %s370, 1
    %372 = vsyncpa [#allocation4], 1
    %s373 = scalar_lea.sflag [#allocation4], 1
    %374 = vsyncpa %s373, 1

</llo_original>
